<compile_context>
chip_gen: v6e
topology: v6e:2x2x1
jax: 0.10.0
libtpu: 0.0.40
codegen_flags: <defaults>
</compile_context>

<pallas_src>
import functools

import jax
import jax.numpy as jnp
from jax.experimental import pallas as pl
from jax.experimental.pallas import tpu as pltpu


def _round_up(x: int, m: int) -> int:
    return (x + m - 1) // m * m


def _ffn_kernel(x_ref, w1_ref, b1_ref, w2_ref, b2_ref, g_ref, beta_ref,
                o_ref, acc_ref, *, eps: float, inv_d: float):
    k = pl.program_id(1)
    nk = pl.num_programs(1)

    @pl.when(k == 0)
    def _init():
        acc_ref[...] = jnp.zeros_like(acc_ref)

    # Keep MXU operands in their storage dtype; accumulate in f32.
    x = x_ref[...]                                   # (tm, D)
    b1 = b1_ref[...].astype(jnp.float32)             # (1, tf), read once

    h = jnp.dot(x, w1_ref[...], preferred_element_type=jnp.float32) + b1
    h = jnp.maximum(h, 0.0)                          # ReLU (f32 VPU)
    acc_ref[...] += jnp.dot(h.astype(w2_ref.dtype), w2_ref[...],
                            preferred_element_type=jnp.float32)

    @pl.when(k == nk - 1)
    def _finalize():
        b2 = b2_ref[...].astype(jnp.float32)
        g = g_ref[...].astype(jnp.float32)
        beta = beta_ref[...].astype(jnp.float32)

        # residual:  y = x + linear2(relu(linear1(x)))
        y = x.astype(jnp.float32) + acc_ref[...] + b2

        # One-pass LayerNorm stats over the model dim.
        s1 = jnp.sum(y, axis=-1, keepdims=True)
        s2 = jnp.sum(y * y, axis=-1, keepdims=True)
        mean = s1 * inv_d
        var = s2 * inv_d - mean * mean
        y_norm = (y - mean) * jax.lax.rsqrt(var + eps)
        o_ref[...] = (y_norm * g + beta).astype(o_ref.dtype)


def _vmem_estimate(tm, tf, D, x_isz, w_isz, o_isz):
    """Rough VMEM working-set size in bytes for the chosen tiling."""
    est = 2 * tm * D * x_isz                 # x tile (double-buffered)
    est += 2 * tm * D * o_isz                # out tile
    est += 2 * D * tf * w_isz                # W1 chunk
    est += 2 * tf * D * w_isz                # W2 chunk
    est += 2 * 8 * tf * 4                    # b1 chunk (sublane padded)
    est += 3 * 2 * 8 * max(D, 128) * 4       # b2, gamma, beta
    est += tm * D * 4                        # f32 accumulator scratch
    est += tm * tf * 4                       # hidden activation headroom
    return est


def ffn_layer(tgt, w1, b1, w2, b2, gamma, beta, *, eps=1e-5, tm=256, tf=None,
              vmem_budget=40 * 2 ** 20):
    """Fused FFN block. tgt: (..., D). w1: (D, F), w2: (F, D)."""
    orig_shape = tgt.shape
    D = orig_shape[-1]
    F = w1.shape[1]
    out_dtype = tgt.dtype

    x = tgt.reshape(-1, D)
    N = x.shape[0]

    x_isz = jnp.dtype(x.dtype).itemsize
    w_isz = jnp.dtype(w1.dtype).itemsize
    o_isz = jnp.dtype(out_dtype).itemsize

    # Row tile: 8-aligned, capped by (padded) N; pad rows instead of asserting.
    tm = max(8, min(_round_up(tm, 8), _round_up(N, 8)))
    N_pad = _round_up(N, tm)
    if N_pad != N:
        x = jnp.pad(x, ((0, N_pad - N), (0, 0)))

    # Hidden-dim chunk: 128-aligned. Auto-shrink until the working set fits the
    # VMEM budget. Zero-padding F is exact: relu(0 @ W1 + 0) = 0 and the
    # matching zero rows of W2 contribute nothing.
    if tf is None:
        tf = _round_up(F, 128)
        while tf > 128 and _vmem_estimate(tm, tf, D, x_isz, w_isz, o_isz) > vmem_budget:
            tf = _round_up(tf // 2, 128)
    else:
        tf = max(128, _round_up(min(tf, F), 128))
    F_pad = _round_up(F, tf)
    if F_pad != F:
        w1 = jnp.pad(w1, ((0, 0), (0, F_pad - F)))
        b1 = jnp.pad(b1, ((0, F_pad - F),))
        w2 = jnp.pad(w2, ((0, F_pad - F), (0, 0)))

    # TODO(synk): for best store throughput D should be a multiple of 128;
    # padding D would require masking the LayerNorm statistics, so it is left
    # unpadded (correct, just masked stores when D < 128).

    b1_2d = b1.reshape(1, F_pad)
    b2_2d = b2.reshape(1, D)
    g_2d = gamma.reshape(1, D)
    beta_2d = beta.reshape(1, D)

    grid = (N_pad // tm, F_pad // tf)

    vmem_limit = int(min(
        64 * 2 ** 20,
        max(16 * 2 ** 20,
            _vmem_estimate(tm, tf, D, x_isz, w_isz, o_isz) + (4 << 20))))

    cost = pl.CostEstimate(
        flops=4 * N_pad * D * F_pad,                      # two matmuls
        transcendentals=N_pad,                            # rsqrt per row
        bytes_accessed=int(N_pad * D * (x_isz + o_isz)
                           + 2 * D * F_pad * w_isz * grid[0]
                           + (F_pad + 3 * D) * w_isz),
    )

    out = pl.pallas_call(
        functools.partial(_ffn_kernel, eps=eps, inv_d=1.0 / D),
        out_shape=jax.ShapeDtypeStruct((N_pad, D), out_dtype),
        grid_spec=pltpu.PrefetchScalarGridSpec(
            num_scalar_prefetch=0,
            grid=grid,
            in_specs=[
                pl.BlockSpec((tm, D), lambda i, k: (i, 0)),      # x rows
                pl.BlockSpec((D, tf), lambda i, k: (0, k)),      # W1 chunk
                pl.BlockSpec((1, tf), lambda i, k: (0, k)),      # b1 chunk
                pl.BlockSpec((tf, D), lambda i, k: (k, 0)),      # W2 chunk
                pl.BlockSpec((1, D), lambda i, k: (0, 0)),       # b2
                pl.BlockSpec((1, D), lambda i, k: (0, 0)),       # gamma
                pl.BlockSpec((1, D), lambda i, k: (0, 0)),       # beta
            ],
            out_specs=pl.BlockSpec((tm, D), lambda i, k: (i, 0)),
            scratch_shapes=[pltpu.VMEM((tm, D), jnp.float32)],
        ),
        compiler_params=pltpu.CompilerParams(
            dimension_semantics=("parallel", "arbitrary"),
            vmem_limit_bytes=vmem_limit),
        cost_estimate=cost,
    )(x, w1, b1_2d, w2, b2_2d, g_2d, beta_2d)

    return out[:N].reshape(orig_shape)


def _xavier_uniform(key, fan_in, fan_out, dtype=jnp.float32):
    bound = (6.0 / (fan_in + fan_out)) ** 0.5
    return jax.random.uniform(key, (fan_in, fan_out), dtype=dtype,
                              minval=-bound, maxval=bound)


def init_ffn_params(key, model_dims, feed_dims, dtype=jnp.float32):
    k1, k2, k3, k4 = jax.random.split(key, 4)
    # Linear weights: xavier_uniform (as in _reset_parameters), stored (in, out).
    w1 = _xavier_uniform(k1, model_dims, feed_dims, dtype)
    w2 = _xavier_uniform(k2, feed_dims, model_dims, dtype)
    # Biases keep PyTorch Linear default: U(-1/sqrt(fan_in), 1/sqrt(fan_in)).
    bnd1 = 1.0 / (model_dims ** 0.5)
    bnd2 = 1.0 / (feed_dims ** 0.5)
    b1 = jax.random.uniform(k3, (feed_dims,), dtype=dtype, minval=-bnd1, maxval=bnd1)
    b2 = jax.random.uniform(k4, (model_dims,), dtype=dtype, minval=-bnd2, maxval=bnd2)
    # LayerNorm affine defaults.
    gamma = jnp.ones((model_dims,), dtype=dtype)
    beta = jnp.zeros((model_dims,), dtype=dtype)
    return w1, b1, w2, b2, gamma, beta


def _reference(tgt, w1, b1, w2, b2, gamma, beta, eps=1e-5):
    h = jnp.maximum(tgt @ w1 + b1, 0.0)
    tgt2 = h @ w2 + b2
    y = tgt + tgt2
    mean = jnp.mean(y, axis=-1, keepdims=True)
    var = jnp.mean(jnp.square(y - mean), axis=-1, keepdims=True)
    return (y - mean) * jax.lax.rsqrt(var + eps) * gamma + beta


if __name__ == "__main__":
    key = jax.random.PRNGKey(0)
    k_in1, k_p1, k_in2, k_p2 = jax.random.split(key, 4)

    # --- Test 1: tiny module-like shapes (D and F below lane width). ---
    seq, batch, model_dims, feed_dims = 8, 2, 32, 64
    tgt1 = jax.random.normal(k_in1, (seq, batch, model_dims), dtype=jnp.float32)
    params1 = init_ffn_params(k_p1, model_dims, feed_dims)

    out1 = jax.block_until_ready(ffn_layer(tgt1, *params1))
    ref1 = _reference(tgt1, *params1)
    assert out1.shape == tgt1.shape
    assert jnp.allclose(out1, ref1, atol=1e-4, rtol=1e-4), "mismatch (test 1)"

    # --- Test 2: 128-aligned shapes, forcing multiple row tiles and F chunks
    # (exercises padding, the accumulator path and the (8,128) tiling). ---
    seq, batch, model_dims, feed_dims = 16, 8, 256, 512
    tgt2 = jax.random.normal(k_in2, (seq, batch, model_dims), dtype=jnp.float32)
    params2 = init_ffn_params(k_p2, model_dims, feed_dims)

    out2 = jax.block_until_ready(ffn_layer(tgt2, *params2, tm=64, tf=128))
    ref2 = _reference(tgt2, *params2)
    assert out2.shape == tgt2.shape
    assert jnp.allclose(out2, ref2, atol=1e-3, rtol=1e-3), "mismatch (test 2)"

    print("KERNEL_OK")
</pallas_src>

<mosaic_0001>
module attributes {stable_mosaic.version = 11 : i64} {
  func.func @_ffn_kernel(%arg0: i32, %arg1: i32, %arg2: memref<16x32xf32, #tpu.memory_space<vmem>>, %arg3: memref<32x128xf32, #tpu.memory_space<vmem>>, %arg4: memref<1x128xf32, #tpu.memory_space<vmem>>, %arg5: memref<128x32xf32, #tpu.memory_space<vmem>>, %arg6: memref<1x32xf32, #tpu.memory_space<vmem>>, %arg7: memref<1x32xf32, #tpu.memory_space<vmem>>, %arg8: memref<1x32xf32, #tpu.memory_space<vmem>>, %arg9: memref<16x32xf32, #tpu.memory_space<vmem>>, %arg10: memref<16x32xf32, #tpu.memory_space<vmem>>) attributes {dimension_semantics = [#tpu.dimension_semantics<parallel>, #tpu.dimension_semantics<arbitrary>], iteration_bounds = array<i64: 1, 1>, scalar_prefetch = 0 : i64, scratch_operands = 1 : i64, tpu.core_type = #tpu.core_type<tc>, window_params = [{transform_indices = @transform_0, window_bounds = array<i64: 16, 32>}, {transform_indices = @transform_1, window_bounds = array<i64: 32, 128>}, {transform_indices = @transform_2, window_bounds = array<i64: 1, 128>}, {transform_indices = @transform_3, window_bounds = array<i64: 128, 32>}, {pipeline_mode = #tpu.pipeline_mode<synchronous>, transform_indices = @transform_4, window_bounds = array<i64: 1, 32>}, {pipeline_mode = #tpu.pipeline_mode<synchronous>, transform_indices = @transform_5, window_bounds = array<i64: 1, 32>}, {pipeline_mode = #tpu.pipeline_mode<synchronous>, transform_indices = @transform_6, window_bounds = array<i64: 1, 32>}, {transform_indices = @transform_7, window_bounds = array<i64: 16, 32>}]} {
    %c0_i32 = arith.constant 0 : i32
    %0 = arith.cmpi eq, %arg1, %c0_i32 : i32
    %1 = arith.extui %0 : i1 to i32
    %c0_i32_0 = arith.constant 0 : i32
    %2 = arith.cmpi ne, %1, %c0_i32_0 : i32
    scf.if %2 {
      %cst_16 = arith.constant 0.000000e+00 : f32
      %19 = vector.broadcast %cst_16 : f32 to vector<16x32xf32>
      %c0_17 = arith.constant 0 : index
      %c0_18 = arith.constant 0 : index
      %20 = vector.load %arg10[%c0_17, %c0_18] : memref<16x32xf32, #tpu.memory_space<vmem>>, vector<16x32xf32>
      tpu.vector_store %arg10[%c0_17, %c0_18], %19 {strides = array<i32>} : memref<16x32xf32, #tpu.memory_space<vmem>>, vector<16x32xf32>,
    } else {
    }
    %c0 = arith.constant 0 : index
    %c0_1 = arith.constant 0 : index
    %3 = vector.load %arg2[%c0, %c0_1] : memref<16x32xf32, #tpu.memory_space<vmem>>, vector<16x32xf32>
    %c0_2 = arith.constant 0 : index
    %c0_3 = arith.constant 0 : index
    %4 = vector.load %arg4[%c0_2, %c0_3] : memref<1x128xf32, #tpu.memory_space<vmem>>, vector<1x128xf32>
    %c0_4 = arith.constant 0 : index
    %c0_5 = arith.constant 0 : index
    %5 = vector.load %arg3[%c0_4, %c0_5] : memref<32x128xf32, #tpu.memory_space<vmem>>, vector<32x128xf32>
    %cst = arith.constant dense<0.000000e+00> : vector<16x128xf32>
    %6 = tpu.matmul %3, %5, %cst {dimension_numbers = #tpu.dot_dimension_numbers<[1], [0], [0], [1], [0, 0, 1, 1], [], []>} : vector<16x32xf32>, vector<32x128xf32>, vector<16x128xf32> -> vector<16x128xf32>
    %7 = vector.broadcast %4 : vector<1x128xf32> to vector<16x128xf32>
    %8 = arith.addf %6, %7 : vector<16x128xf32>
    %cst_6 = arith.constant 0.000000e+00 : f32
    %9 = vector.broadcast %cst_6 : f32 to vector<16x128xf32>
    %10 = arith.maximumf %8, %9 : vector<16x128xf32>
    %c0_7 = arith.constant 0 : index
    %c0_8 = arith.constant 0 : index
    %11 = vector.load %arg10[%c0_7, %c0_8] : memref<16x32xf32, #tpu.memory_space<vmem>>, vector<16x32xf32>
    %c0_9 = arith.constant 0 : index
    %c0_10 = arith.constant 0 : index
    %12 = vector.load %arg5[%c0_9, %c0_10] : memref<128x32xf32, #tpu.memory_space<vmem>>, vector<128x32xf32>
    %cst_11 = arith.constant dense<0.000000e+00> : vector<16x32xf32>
    %13 = tpu.matmul %10, %12, %cst_11 {dimension_numbers = #tpu.dot_dimension_numbers<[1], [0], [0], [1], [0, 0, 1, 1], [], []>} : vector<16x128xf32>, vector<128x32xf32>, vector<16x32xf32> -> vector<16x32xf32>
    %14 = arith.addf %11, %13 : vector<16x32xf32>
    %c0_12 = arith.constant 0 : index
    %c0_13 = arith.constant 0 : index
    %15 = vector.load %arg10[%c0_12, %c0_13] : memref<16x32xf32, #tpu.memory_space<vmem>>, vector<16x32xf32>
    tpu.vector_store %arg10[%c0_12, %c0_13], %14 {strides = array<i32>} : memref<16x32xf32, #tpu.memory_space<vmem>>, vector<16x32xf32>,
    %c0_i32_14 = arith.constant 0 : i32
    %16 = arith.cmpi eq, %arg1, %c0_i32_14 : i32
    %17 = arith.extui %16 : i1 to i32
    %c0_i32_15 = arith.constant 0 : i32
    %18 = arith.cmpi ne, %17, %c0_i32_15 : i32
    scf.if %18 {
      %c0_16 = arith.constant 0 : index
      %c0_17 = arith.constant 0 : index
      %19 = vector.load %arg6[%c0_16, %c0_17] : memref<1x32xf32, #tpu.memory_space<vmem>>, vector<1x32xf32>
      %c0_18 = arith.constant 0 : index
      %c0_19 = arith.constant 0 : index
      %20 = vector.load %arg7[%c0_18, %c0_19] : memref<1x32xf32, #tpu.memory_space<vmem>>, vector<1x32xf32>
      %c0_20 = arith.constant 0 : index
      %c0_21 = arith.constant 0 : index
      %21 = vector.load %arg8[%c0_20, %c0_21] : memref<1x32xf32, #tpu.memory_space<vmem>>, vector<1x32xf32>
      %c0_22 = arith.constant 0 : index
      %c0_23 = arith.constant 0 : index
      %22 = vector.load %arg10[%c0_22, %c0_23] : memref<16x32xf32, #tpu.memory_space<vmem>>, vector<16x32xf32>
      %23 = arith.addf %3, %22 : vector<16x32xf32>
      %24 = vector.broadcast %19 : vector<1x32xf32> to vector<16x32xf32>
      %25 = arith.addf %23, %24 : vector<16x32xf32>
      %cst_24 = arith.constant dense<0.000000e+00> : vector<16xf32>
      %26 = vector.multi_reduction <add>, %25, %cst_24 [1] : vector<16x32xf32> to vector<16xf32>
      %27 = vector.shape_cast %26 : vector<16xf32> to vector<16x1xf32>
      %28 = arith.mulf %25, %25 : vector<16x32xf32>
      %cst_25 = arith.constant dense<0.000000e+00> : vector<16xf32>
      %29 = vector.multi_reduction <add>, %28, %cst_25 [1] : vector<16x32xf32> to vector<16xf32>
      %30 = vector.shape_cast %29 : vector<16xf32> to vector<16x1xf32>
      %cst_26 = arith.constant 3.125000e-02 : f32
      %31 = vector.broadcast %cst_26 : f32 to vector<16x1xf32>
      %32 = arith.mulf %27, %31 : vector<16x1xf32>
      %cst_27 = arith.constant 3.125000e-02 : f32
      %33 = vector.broadcast %cst_27 : f32 to vector<16x1xf32>
      %34 = arith.mulf %30, %33 : vector<16x1xf32>
      %35 = arith.mulf %32, %32 : vector<16x1xf32>
      %36 = arith.subf %34, %35 : vector<16x1xf32>
      %37 = vector.broadcast %32 : vector<16x1xf32> to vector<16x32xf32>
      %38 = arith.subf %25, %37 : vector<16x32xf32>
      %cst_28 = arith.constant 9.99999974E-6 : f32
      %39 = vector.broadcast %cst_28 : f32 to vector<16x1xf32>
      %40 = arith.addf %36, %39 : vector<16x1xf32>
      %41 = math.rsqrt %40 : vector<16x1xf32>
      %42 = vector.broadcast %41 : vector<16x1xf32> to vector<16x32xf32>
      %43 = arith.mulf %38, %42 : vector<16x32xf32>
      %44 = vector.broadcast %20 : vector<1x32xf32> to vector<16x32xf32>
      %45 = arith.mulf %43, %44 : vector<16x32xf32>
      %46 = vector.broadcast %21 : vector<1x32xf32> to vector<16x32xf32>
      %47 = arith.addf %45, %46 : vector<16x32xf32>
      %c0_29 = arith.constant 0 : index
      %c0_30 = arith.constant 0 : index
      %48 = vector.load %arg9[%c0_29, %c0_30] : memref<16x32xf32, #tpu.memory_space<vmem>>, vector<16x32xf32>
      tpu.vector_store %arg9[%c0_29, %c0_30], %47 {strides = array<i32>} : memref<16x32xf32, #tpu.memory_space<vmem>>, vector<16x32xf32>,
    } else {
    }
    return
  }
  func.func @transform_0(%arg0: i32, %arg1: i32) -> (i32, i32) {
    %c0_i32 = arith.constant 0 : i32
    %c0_i32_0 = arith.constant 0 : i32
    return %arg0, %c0_i32 : i32, i32
  }
  func.func @transform_1(%arg0: i32, %arg1: i32) -> (i32, i32) {
    %c0_i32 = arith.constant 0 : i32
    %c0_i32_0 = arith.constant 0 : i32
    return %c0_i32, %arg1 : i32, i32
  }
  func.func @transform_2(%arg0: i32, %arg1: i32) -> (i32, i32) {
    %c0_i32 = arith.constant 0 : i32
    %c0_i32_0 = arith.constant 0 : i32
    return %c0_i32, %arg1 : i32, i32
  }
  func.func @transform_3(%arg0: i32, %arg1: i32) -> (i32, i32) {
    %c0_i32 = arith.constant 0 : i32
    %c0_i32_0 = arith.constant 0 : i32
    return %arg1, %c0_i32 : i32, i32
  }
  func.func @transform_4(%arg0: i32, %arg1: i32) -> (i32, i32) {
    %c0_i32 = arith.constant 0 : i32
    %c0_i32_0 = arith.constant 0 : i32
    %c0_i32_1 = arith.constant 0 : i32
    return %c0_i32, %c0_i32_0 : i32, i32
  }
  func.func @transform_5(%arg0: i32, %arg1: i32) -> (i32, i32) {
    %c0_i32 = arith.constant 0 : i32
    %c0_i32_0 = arith.constant 0 : i32
    %c0_i32_1 = arith.constant 0 : i32
    return %c0_i32, %c0_i32_0 : i32, i32
  }
  func.func @transform_6(%arg0: i32, %arg1: i32) -> (i32, i32) {
    %c0_i32 = arith.constant 0 : i32
    %c0_i32_0 = arith.constant 0 : i32
    %c0_i32_1 = arith.constant 0 : i32
    return %c0_i32, %c0_i32_0 : i32, i32
  }
  func.func @transform_7(%arg0: i32, %arg1: i32) -> (i32, i32) {
    %c0_i32 = arith.constant 0 : i32
    %c0_i32_0 = arith.constant 0 : i32
    return %arg0, %c0_i32 : i32, i32
  }
}

</mosaic_0001>

<llo_original>
// kernel: tpu_custom_call.1
$region0: #{tpu_custom_call.1}
  #allocation0 [shape = 'u32[]', space=smem, size = 0x4, offset = 0x4, fixed_abs, tag = 'smem constant byte address 0x4 - core index']
  #allocation1 [shape = 'u32[144,128]{1,0:T(1,128)}', space=vmem, size = 0x12000, scoped, tag = 'internal scratch']
  #allocation2 [shape = 'f32[16,32]{1,0:T(8,128)}', space=vmem, size = 0x2000, scoped, tag = 'scratch operand']
  %s0 = inlined_call_operand.vmem [shape: f32[16,32], index: 0, kind: input, shape index: {}]
  %s1 = inlined_call_operand.vmem [shape: f32[32,128], index: 1, kind: input, shape index: {}]
  %s2 = inlined_call_operand.vmem [shape: f32[1,128], index: 2, kind: input, shape index: {}]
  %s3 = inlined_call_operand.vmem [shape: f32[128,32], index: 3, kind: input, shape index: {}]
  %s4 = inlined_call_operand.vmem [shape: f32[1,32], index: 4, kind: input, shape index: {}]
  %s5 = inlined_call_operand.vmem [shape: f32[1,32], index: 5, kind: input, shape index: {}]
  %s6 = inlined_call_operand.vmem [shape: f32[1,32], index: 6, kind: input, shape index: {}]
  %s7 = inlined_call_operand.hbm [shape: f32[16,32], index: 7, kind: output, shape index: {}]
  %s8 = sld [smem:[#allocation0]]
  $region46: #{tpu_custom_call.1} parent=0
    _
  %s10 = ssub.s32 1, %s8
  %s11 = scalar_select 0, %s10, %s8
  $region1: #{tpu_custom_call.1} parent=0
    #allocation3 [shape = 'u8[8192]{0}', space=vmem, size = 0x2000, scoped, tag = 'output window, operand 0, single buffered']
    #allocation4 [shape = 's32[1]{0}', space=sflag, size = 0x4, scoped, tag = 'scoped memory for tpu_custom_call.1']
    %12 = vsyncpa [#allocation4], 0
    // Predicated region
    $region2: #{tpu_custom_call.1} parent=1 // pred_check
      _
    $region3: #{tpu_custom_call.1} parent=1 // pred_check_branch
      %14 = sbr.rel (0) target = $region5
    $region4: #{tpu_custom_call.1} parent=1 // pred_region
      _
    $region5: #{tpu_custom_call.1} parent=1 // pred_fallthru
      _
    // Predicated region
    $region6: #{tpu_custom_call.1} parent=1 // pred_check
      _
    $region7: #{tpu_custom_call.1} parent=1 // pred_check_branch
      %16 = sbr.rel (0) target = $region9
    $region8: #{tpu_custom_call.1} parent=1 // pred_region
      _
    $region9: #{tpu_custom_call.1} parent=1 // pred_fallthru
      _
    // Predicated region
    $region10: #{tpu_custom_call.1} parent=1 // pred_check
      _
    $region11: #{tpu_custom_call.1} parent=1 // pred_check_branch
      %18 = sbr.rel (0) target = $region13
    $region12: #{tpu_custom_call.1} parent=1 // pred_region
      _
    $region13: #{tpu_custom_call.1} parent=1 // pred_fallthru
      _
    // Predicated region
    $region14: #{tpu_custom_call.1} parent=1 // pred_check
      _
    $region15: #{tpu_custom_call.1} parent=1 // pred_check_branch
      %20 = sbr.rel (0) target = $region17
    $region16: #{tpu_custom_call.1} parent=1 // pred_region
      _
    $region17: #{tpu_custom_call.1} parent=1 // pred_fallthru
      _
    // Predicated region
    $region18: #{tpu_custom_call.1} parent=1 // pred_check
      _
    $region19: #{tpu_custom_call.1} parent=1 // pred_check_branch
      %22 = sbr.rel (0) target = $region21
    $region20: #{tpu_custom_call.1} parent=1 // pred_region
      _
    $region21: #{tpu_custom_call.1} parent=1 // pred_fallthru
      _
    // Predicated region
    $region22: #{tpu_custom_call.1} parent=1 // pred_check
      _
    $region23: #{tpu_custom_call.1} parent=1 // pred_check_branch
      %24 = sbr.rel (0) target = $region25
    $region24: #{tpu_custom_call.1} parent=1 // pred_region
      _
    $region25: #{tpu_custom_call.1} parent=1 // pred_fallthru
      _
    // Predicated region
    $region26: #{tpu_custom_call.1} parent=1 // pred_check
      _
    $region27: #{tpu_custom_call.1} parent=1 // pred_check_branch
      %26 = sbr.rel (0) target = $region29
    $region28: #{tpu_custom_call.1} parent=1 // pred_region
      _
    $region29: #{tpu_custom_call.1} parent=1 // pred_fallthru
      _
    %p27 = scmp.eq.s32.totalorder 0, 0
    // Predicated region
    $region30: #{tpu_custom_call.1} parent=1 // pred_check
      %p28 = pneg %p27
    $region31: #{tpu_custom_call.1} parent=1 // pred_check_branch
      %30 = sbr.rel (%p28) target = $region33
    $region32: #{tpu_custom_call.1} parent=1 // pred_region
      %vm31 = vcmask 261120
      %32 = vst.msk [vmem:[#allocation2] sm:$0xff] %vm31, 0.0
      %33 = vst.msk [vmem:[#allocation2 + $0x8] sm:$0xff] %vm31, 0.0
    $region33: #{tpu_custom_call.1} parent=1 // pred_fallthru
      _
    %v34 = vld [vmem:[%s0] sm:$0xff]
    %v35 = vld [vmem:[%s0 + $0x8] sm:$0xff]
    %v36 = vld [vmem:[%s2] sm:$0x1]
    %v37 = vld [vmem:[%s1] sm:$0xff]
    %v38 = vld [vmem:[%s1 + $0x8] sm:$0xff]
    %v39 = vld [vmem:[%s1 + $0x10] sm:$0xff]
    %v40 = vld [vmem:[%s1 + $0x18] sm:$0xff]
    %v42 = vlaneseq
    %v43 = vshrl.u32 %v42, 7
    %v44 = vsub.s32 0, %v43
    %v45 = vrot.slane %v36, %v44
    %vm47 = vcmask 261120
    %v49 = vsel %vm47, %v34, 0
    %v52 = vsel %vm47, %v35, 0
    %54 = vmatprep.subr.mxu0 0.0
    %55 = vmatpush1.msra.mxu0 0.0
    %56 = vmatprep.subr.mxu0 0.0
    %57 = vmatpush1.msra.mxu0 0.0
    %58 = vmatprep.subr.mxu0 0.0
    %59 = vmatpush1.msra.mxu0 0.0
    %60 = vmatprep.subr.mxu0 0.0
    %61 = vmatpush1.msra.mxu0 0.0
    %62 = vmatprep.subr.mxu0 0.0
    %63 = vmatpush1.msra.mxu0 0.0
    %64 = vmatprep.subr.mxu0 0.0
    %65 = vmatpush1.msra.mxu0 0.0
    %66 = vmatprep.subr.mxu0 0.0
    %67 = vmatpush1.msra.mxu0 0.0
    %68 = vmatprep.subr.mxu0 0.0
    %69 = vmatpush1.msra.mxu0 0.0
    %70 = vmatprep.subr.mxu0 0.0
    %71 = vmatpush1.msra.mxu0 0.0
    %72 = vmatprep.subr.mxu0 0.0
    %73 = vmatpush1.msra.mxu0 0.0
    %74 = vmatprep.subr.mxu0 0.0
    %75 = vmatpush1.msra.mxu0 0.0
    %76 = vmatprep.subr.mxu0 0.0
    %77 = vmatpush1.msra.mxu0 0.0
    %78 = vmatprep.subr.mxu0 0.0
    %79 = vmatpush1.msra.mxu0 %v40
    %80 = vmatprep.subr.mxu0 0.0
    %81 = vmatpush1.msra.mxu0 %v39
    %82 = vmatprep.subr.mxu0 0.0
    %83 = vmatpush1.msra.mxu0 %v38
    %84 = vmatprep.subr.mxu0 0.0
    %85 = vmatpush1.msra.mxu0 %v37
    %86 = vmatprep.subr.mxu0 0.0
    %87 = vmatpush2.msra.mxu0 0.0
    %88 = vmatprep.subr.mxu0 0.0
    %89 = vmatpush2.msra.mxu0 0.0
    %90 = vmatprep.subr.mxu0 0.0
    %91 = vmatpush2.msra.mxu0 0.0
    %92 = vmatprep.subr.mxu0 0.0
    %93 = vmatpush2.msra.mxu0 0.0
    %94 = vmatprep.subr.mxu0 0.0
    %95 = vmatpush2.msra.mxu0 0.0
    %96 = vmatprep.subr.mxu0 0.0
    %97 = vmatpush2.msra.mxu0 0.0
    %98 = vmatprep.subr.mxu0 0.0
    %99 = vmatpush2.msra.mxu0 0.0
    %100 = vmatprep.subr.mxu0 0.0
    %101 = vmatpush2.msra.mxu0 0.0
    %102 = vmatprep.subr.mxu0 0.0
    %103 = vmatpush2.msra.mxu0 0.0
    %104 = vmatprep.subr.mxu0 0.0
    %105 = vmatpush2.msra.mxu0 0.0
    %106 = vmatprep.subr.mxu0 0.0
    %107 = vmatpush2.msra.mxu0 0.0
    %108 = vmatprep.subr.mxu0 0.0
    %109 = vmatpush2.msra.mxu0 0.0
    %110 = vmatprep.subr.mxu0 0.0
    %111 = vmatpush2.msra.mxu0 0.0
    %112 = vmatprep.subr.mxu0 0.0
    %113 = vmatpush2.msra.mxu0 0.0
    %114 = vmatprep.subr.mxu0 0.0
    %115 = vmatpush2.msra.mxu0 0.0
    %116 = vmatprep.subr.mxu0 0.0
    %117 = vmatpush2.msra.mxu0 0.0
    %118 = vmatprep.mubr.f32.mxu0 0.0
    %119 = vmatmul.mubr.f32.gmra.mxu0 %v49
    %v120 = vpop.f32.mrf.mxu0
    %v121 = vadd.f32 %v45, %v120
    %v122 = vpop.f32.mrf.mxu0
    %123 = vmatprep.mubr.f32.mxu0 0.0
    %124 = vmatmul.mubr.f32.gmra.mxu0 %v52
    %v125 = vpop.f32.mrf.mxu0
    %v126 = vadd.f32 %v45, %v125
    %v127 = vpop.f32.mrf.mxu0
    %128 = vdwg.mxu0
    %v129 = vmax.f32 %v121, 0.0
    %v130 = vmax.f32 %v126, 0.0
    %v131 = vld [vmem:[#allocation2] sm:$0xff]
    %v132 = vld [vmem:[#allocation2 + $0x8] sm:$0xff]
    %v133 = vld [vmem:[%s3] sm:$0xff]
    %v134 = vld [vmem:[%s3 + $0x8] sm:$0xff]
    %v135 = vld [vmem:[%s3 + $0x10] sm:$0xff]
    %v136 = vld [vmem:[%s3 + $0x18] sm:$0xff]
    %v137 = vld [vmem:[%s3 + $0x20] sm:$0xff]
    %v138 = vld [vmem:[%s3 + $0x28] sm:$0xff]
    %v139 = vld [vmem:[%s3 + $0x30] sm:$0xff]
    %v140 = vld [vmem:[%s3 + $0x38] sm:$0xff]
    %v141 = vld [vmem:[%s3 + $0x40] sm:$0xff]
    %v142 = vld [vmem:[%s3 + $0x48] sm:$0xff]
    %v143 = vld [vmem:[%s3 + $0x50] sm:$0xff]
    %v144 = vld [vmem:[%s3 + $0x58] sm:$0xff]
    %v145 = vld [vmem:[%s3 + $0x60] sm:$0xff]
    %v146 = vld [vmem:[%s3 + $0x68] sm:$0xff]
    %v147 = vld [vmem:[%s3 + $0x70] sm:$0xff]
    %v148 = vld [vmem:[%s3 + $0x78] sm:$0xff]
    %149 = vmatprep.subr.mxu0 0.0
    %150 = vmatpush1.msra.mxu0 %v148
    %151 = vmatprep.subr.mxu0 0.0
    %152 = vmatpush1.msra.mxu0 %v147
    %153 = vmatprep.subr.mxu0 0.0
    %154 = vmatpush1.msra.mxu0 %v146
    %155 = vmatprep.subr.mxu0 0.0
    %156 = vmatpush1.msra.mxu0 %v145
    %157 = vmatprep.subr.mxu0 0.0
    %158 = vmatpush1.msra.mxu0 %v144
    %159 = vmatprep.subr.mxu0 0.0
    %160 = vmatpush1.msra.mxu0 %v143
    %161 = vmatprep.subr.mxu0 0.0
    %162 = vmatpush1.msra.mxu0 %v142
    %163 = vmatprep.subr.mxu0 0.0
    %164 = vmatpush1.msra.mxu0 %v141
    %165 = vmatprep.subr.mxu0 0.0
    %166 = vmatpush1.msra.mxu0 %v140
    %167 = vmatprep.subr.mxu0 0.0
    %168 = vmatpush1.msra.mxu0 %v139
    %169 = vmatprep.subr.mxu0 0.0
    %170 = vmatpush1.msra.mxu0 %v138
    %171 = vmatprep.subr.mxu0 0.0
    %172 = vmatpush1.msra.mxu0 %v137
    %173 = vmatprep.subr.mxu0 0.0
    %174 = vmatpush1.msra.mxu0 %v136
    %175 = vmatprep.subr.mxu0 0.0
    %176 = vmatpush1.msra.mxu0 %v135
    %177 = vmatprep.subr.mxu0 0.0
    %178 = vmatpush1.msra.mxu0 %v134
    %179 = vmatprep.subr.mxu0 0.0
    %180 = vmatpush1.msra.mxu0 %v133
    %181 = vmatprep.subr.mxu0 0.0
    %182 = vmatpush2.msra.mxu0 0.0
    %183 = vmatprep.subr.mxu0 0.0
    %184 = vmatpush2.msra.mxu0 0.0
    %185 = vmatprep.subr.mxu0 0.0
    %186 = vmatpush2.msra.mxu0 0.0
    %187 = vmatprep.subr.mxu0 0.0
    %188 = vmatpush2.msra.mxu0 0.0
    %189 = vmatprep.subr.mxu0 0.0
    %190 = vmatpush2.msra.mxu0 0.0
    %191 = vmatprep.subr.mxu0 0.0
    %192 = vmatpush2.msra.mxu0 0.0
    %193 = vmatprep.subr.mxu0 0.0
    %194 = vmatpush2.msra.mxu0 0.0
    %195 = vmatprep.subr.mxu0 0.0
    %196 = vmatpush2.msra.mxu0 0.0
    %197 = vmatprep.subr.mxu0 0.0
    %198 = vmatpush2.msra.mxu0 0.0
    %199 = vmatprep.subr.mxu0 0.0
    %200 = vmatpush2.msra.mxu0 0.0
    %201 = vmatprep.subr.mxu0 0.0
    %202 = vmatpush2.msra.mxu0 0.0
    %203 = vmatprep.subr.mxu0 0.0
    %204 = vmatpush2.msra.mxu0 0.0
    %205 = vmatprep.subr.mxu0 0.0
    %206 = vmatpush2.msra.mxu0 0.0
    %207 = vmatprep.subr.mxu0 0.0
    %208 = vmatpush2.msra.mxu0 0.0
    %209 = vmatprep.subr.mxu0 0.0
    %210 = vmatpush2.msra.mxu0 0.0
    %211 = vmatprep.subr.mxu0 0.0
    %212 = vmatpush2.msra.mxu0 0.0
    %213 = vmatprep.mubr.f32.mxu0 0.0
    %214 = vmatmul.mubr.f32.gmra.mxu0 %v129
    %v215 = vpop.f32.mrf.mxu0
    %v216 = vadd.f32 0.0, %v215
    %v217 = vpop.f32.mrf.mxu0
    %218 = vmatprep.mubr.f32.mxu0 0.0
    %219 = vmatmul.mubr.f32.gmra.mxu0 %v130
    %v220 = vpop.f32.mrf.mxu0
    %v221 = vadd.f32 0.0, %v220
    %v222 = vpop.f32.mrf.mxu0
    %223 = vdwg.mxu0
    %v224 = vadd.f32 %v131, %v216
    %v225 = vadd.f32 %v132, %v221
    %226 = vst.msk [vmem:[#allocation2] sm:$0xff] %vm47, %v224
    %227 = vst.msk [vmem:[#allocation2 + $0x8] sm:$0xff] %vm47, %v225
    // Predicated region
    $region34: #{tpu_custom_call.1} parent=1 // pred_check
      %p228 = pneg %p27
    $region35: #{tpu_custom_call.1} parent=1 // pred_check_branch
      %230 = sbr.rel (%p228) target = $region37
    $region36: #{tpu_custom_call.1} parent=1 // pred_region
      %v231 = vld [vmem:[%s4] sm:$0x1]
      %v232 = vld [vmem:[%s5] sm:$0x1]
      %v233 = vld [vmem:[%s6] sm:$0x1]
      %v234 = vld [vmem:[#allocation2] sm:$0xff]
      %v235 = vld [vmem:[#allocation2 + $0x8] sm:$0xff]
      %v236 = vadd.f32 %v34, %v234
      %v237 = vadd.f32 %v35, %v235
      %v239 = vlaneseq
      %v240 = vshrl.u32 %v239, 7
      %v241 = vsub.s32 0, %v240
      %v242 = vrot.slane %v231, %v241
      %v244 = vadd.f32 %v236, %v242
      %v245 = vadd.f32 %v237, %v242
      %v246 = vsel %vm47, %v244, 0.0
      %247 = vadd.xlane.f32.xlu0 %v246
      %v248 = vpop.xlane.xlu0 %247
      %v249 = vsel %vm47, %v245, 0.0
      %250 = vadd.xlane.f32.xlu0 %v249
      %v251 = vpop.xlane.xlu0 %250
      %v252 = vmul.f32 %v244, %v244
      %v253 = vmul.f32 %v245, %v245
      %v254 = vsel %vm47, %v252, 0.0
      %255 = vadd.xlane.f32.xlu0 %v254
      %v256 = vpop.xlane.xlu0 %255
      %v257 = vsel %vm47, %v253, 0.0
      %258 = vadd.xlane.f32.xlu0 %v257
      %v259 = vpop.xlane.xlu0 %258
      %v260 = vmul.f32 %v248, 0.03125
      %v261 = vmul.f32 %v251, 0.03125
      %v262 = vmul.f32 %v256, 0.03125
      %v263 = vmul.f32 %v259, 0.03125
      %v264 = vmul.f32 %v260, %v260
      %v265 = vmul.f32 %v261, %v261
      %v266 = vsub.f32 %v262, %v264
      %v267 = vsub.f32 %v263, %v265
      %v268 = vsub.f32 %v244, %v260
      %v269 = vsub.f32 %v245, %v261
      %v270 = vadd.f32 %v266, 1e-05
      %v271 = vadd.f32 %v267, 1e-05
      %v272 = vrsqrt.pop %v270
      %v273 = vrsqrt.pop %v271
      %v274 = vmul.f32 %v268, %v272
      %v275 = vmul.f32 %v269, %v273
      %v277 = vlaneseq
      %v278 = vshrl.u32 %v277, 7
      %v279 = vsub.s32 0, %v278
      %v280 = vrot.slane %v232, %v279
      %v282 = vmul.f32 %v274, %v280
      %v283 = vmul.f32 %v275, %v280
      %v285 = vlaneseq
      %v286 = vshrl.u32 %v285, 7
      %v287 = vsub.s32 0, %v286
      %v288 = vrot.slane %v233, %v287
      %v290 = vadd.f32 %v282, %v288
      %v291 = vadd.f32 %v283, %v288
      %292 = vst.msk [vmem:[#allocation3] sm:$0xff] %vm47, %v290
      %293 = vst.msk [vmem:[#allocation3 + $0x8] sm:$0xff] %vm47, %v291
    $region37: #{tpu_custom_call.1} parent=1 // pred_fallthru
      _
    // Predicated region
    $region38: #{tpu_custom_call.1} parent=1 // pred_check
      _
    $region39: #{tpu_custom_call.1} parent=1 // pred_check_branch
      %295 = sbr.rel (0) target = $region41
    $region40: #{tpu_custom_call.1} parent=1 // pred_region
      %s297 = ssub.s32 256, 256
      %298 = vsyncadd [#allocation4], %s297
      %s299 = sshll.u32 [#allocation3], 4
      %s300 = int_to_ptr.vmem [resolvable:$true] %s299
      %305 = dma.vmem_to_hbm [thread:$0]  %s300, 256, %s7, [#allocation4], 128, 128, 8
    $region41: #{tpu_custom_call.1} parent=1 // pred_fallthru
      _
    // Predicated region
    $region42: #{tpu_custom_call.1} parent=1 // pred_check
      _
    $region43: #{tpu_custom_call.1} parent=1 // pred_check_branch
      %307 = sbr.rel (0) target = $region45
    $region44: #{tpu_custom_call.1} parent=1 // pred_region
      %308 = dma.done [#allocation4], 256
    $region45: #{tpu_custom_call.1} parent=1 // pred_fallthru
      _
    %309 = vsyncpa [#allocation4], 1

</llo_original>
